<compile_context>
chip_gen: v5e
topology: v5e:2x2
jax: 0.10.0
libtpu: 0.0.40
codegen_flags: <defaults>
</compile_context>

<pallas_src>
import functools

import jax
import jax.numpy as jnp
import numpy as np
from jax.experimental import pallas as pl
from jax.experimental.pallas import tpu as pltpu

EPS = 1e-8
_F32 = jnp.float32
_VMEM_CAP_BYTES = 64 * 2**20      # <= physical VMEM on every current generation (v7x: 64 MiB)
_VMEM_FLOOR_BYTES = 16 * 2**20    # never go below the smallest default scoped limit (v5e)
_FUSED_BYTES_BUDGET = 12 * 2**20  # above this the pointwise block switches to the 2-pass path


def _compiler_params(block_floats, semantics):
    """dimension_semantics + a VMEM limit derived from the actual per-step block footprint."""
    need = 4 * int(block_floats) * 2                 # f32 bytes, double-buffered pipeline
    limit = int(min(_VMEM_CAP_BYTES, max(_VMEM_FLOOR_BYTES, 2 * need)))
    return pltpu.CompilerParams(dimension_semantics=semantics, vmem_limit_bytes=limit)


# --------------------------------------------------------------------------------------
# In-kernel helpers
# --------------------------------------------------------------------------------------
def _gln_fold(y, gamma, beta):
    """GlobalLayerNorm over the whole tile: one pass of stats + folded per-channel scale/shift."""
    inv_n = 1.0 / y.size
    mean = jnp.sum(y) * inv_n
    var = jnp.maximum(jnp.sum(y * y) * inv_n - mean * mean, 0.0)
    scale = gamma * jax.lax.rsqrt(var + EPS)          # (C, 1)
    shift = beta - mean * scale                       # (C, 1)
    return y * scale + shift


_ROLL_SIGN = None  # +1: pltpu.roll == jnp.roll, -1: reversed, 0: unusable -> slice+pad fallback


def _probe_roll():
    """One tiny on-device probe so the XLU-roll fast path can never silently flip direction."""
    global _ROLL_SIGN
    if _ROLL_SIGN is not None:
        return _ROLL_SIGN
    x = jnp.arange(8 * 128, dtype=_F32).reshape(8, 128)

    def k(x_ref, o_ref):
        o_ref[...] = pltpu.roll(x_ref[...], 1, axis=1)

    try:
        y = pl.pallas_call(k, out_shape=jax.ShapeDtypeStruct((8, 128), _F32))(x)
        y = np.asarray(jax.block_until_ready(y))
        if np.array_equal(y, np.asarray(jnp.roll(x, 1, axis=1))):
            _ROLL_SIGN = 1
        elif np.array_equal(y, np.asarray(jnp.roll(x, -1, axis=1))):
            _ROLL_SIGN = -1
        else:
            _ROLL_SIGN = 0
    except Exception:
        _ROLL_SIGN = 0
    return _ROLL_SIGN


def _shift1(x, direction):
    """Shift by one along the last axis with zero fill.

    direction=+1 -> out[t] = x[t-1];  direction=-1 -> out[t] = x[t+1].
    Uses pltpu.roll (XLU slot, no VALU/store copies) + a boundary mask when the lane dim is
    128-aligned; falls back to slice + zero-pad on tiny/unaligned tiles.
    """
    n = x.shape[-1]
    sign = _ROLL_SIGN if _ROLL_SIGN is not None else 0
    if n % 128 == 0 and sign != 0:
        want = 1 if direction > 0 else n - 1          # jnp.roll-style shift we want
        eff = want if sign == 1 else (n - want) % n
        rolled = pltpu.roll(x, eff, axis=x.ndim - 1)
        col = jax.lax.broadcasted_iota(jnp.int32, x.shape, x.ndim - 1)
        edge = 0 if direction > 0 else n - 1
        return jnp.where(col == edge, 0.0, rolled)
    z = jnp.zeros(x.shape[:-1] + (1,), x.dtype)
    if direction > 0:
        return jnp.concatenate([z, x[..., :-1]], axis=-1)
    return jnp.concatenate([x[..., 1:], z], axis=-1)


def _upsample_nearest(p, f):
    """(C, Ts) -> (C, Ts*f) nearest repeat on the MXU via a 0/1 selection matrix.

    Implements repeat(W @ x, f) == W @ repeat(x, f) without an HBM round-trip.
    # TODO(synk): at production T replace the (Ts, Ts*f) selection matmul with a
    # relayout-free element repeat (sublane-strided store / low-res block indexing).
    """
    if f == 1:
        return p
    ts = p.shape[-1]
    tf = ts * f
    rows = jax.lax.broadcasted_iota(jnp.int32, (ts, tf), 0)
    cols = jax.lax.broadcasted_iota(jnp.int32, (ts, tf), 1)
    sel = jnp.where((cols >= rows * f) & (cols < (rows + 1) * f), 1.0, 0.0)
    return jnp.dot(p, sel, preferred_element_type=jnp.float32)


# --------------------------------------------------------------------------------------
# Depthwise stride-2 conv (k=5, pad=2, groups=C) + GlobalLayerNorm  (Identity activation)
# --------------------------------------------------------------------------------------
def _dwconv_gln_kernel(xe_ref, xo_ref, prm_ref, o_ref):
    """out[c,t] = w0*xe[t-1] + w1*xo[t-1] + w2*xe[t] + w3*xo[t] + w4*xe[t+1] + bias, then GLN.

    xe[t] = x[2t], xo[t] = x[2t+1].  prm packs [w0..w4, bias, gamma, beta] per channel.
    """
    xe = xe_ref[0]                       # (C, To)
    xo = xo_ref[0]
    prm = prm_ref[...]                   # (C, 8)
    y = (prm[:, 0:1] * _shift1(xe, +1)
         + prm[:, 1:2] * _shift1(xo, +1)
         + prm[:, 2:3] * xe
         + prm[:, 3:4] * xo
         + prm[:, 4:5] * _shift1(xe, -1)
         + prm[:, 5:6])
    o_ref[0] = _gln_fold(y, prm[:, 6:7], prm[:, 7:8])


def dwconv_gln_pallas(x, w, bias, gamma, beta):
    """x: (B, C, T) -> (B, C, T // 2).

    Kept single-pass over the full (C, T//2) tile: its footprint is only ~3*C*T/2 f32, which
    fits comfortably (even at conv_dim=512 and multi-thousand T) within 64 MiB VMEM.
    """
    B, C, T = x.shape
    assert T % 2 == 0, f"stride-2 ConvBlock needs an even sequence length, got T={T}"
    assert w.shape == (C, 5), w.shape
    To = T // 2
    _probe_roll()  # memoised; decides the roll fast path before the kernel is traced
    # TODO(synk): fuse this even/odd de-interleave into the producing kernel (or use an
    # in-kernel strided load) to save one HBM round-trip per stride-2 conv.
    xr = x.reshape(B, C, To, 2)
    xe, xo = xr[..., 0], xr[..., 1]
    prm = jnp.concatenate(
        [w, bias[:, None], gamma[:, None], beta[:, None]], axis=1).astype(_F32)  # (C, 8)
    block_floats = 3 * C * To + C * 8
    return pl.pallas_call(
        _dwconv_gln_kernel,
        out_shape=jax.ShapeDtypeStruct((B, C, To), _F32),
        grid=(B,),
        in_specs=[
            pl.BlockSpec((1, C, To), lambda b: (b, 0, 0)),
            pl.BlockSpec((1, C, To), lambda b: (b, 0, 0)),
            pl.BlockSpec((C, 8), lambda b: (0, 0)),
        ],
        out_specs=pl.BlockSpec((1, C, To), lambda b: (b, 0, 0)),
        compiler_params=_compiler_params(block_floats, ("parallel",)),
    )(xe, xo, prm)


# --------------------------------------------------------------------------------------
# 1x1 conv over a (never materialised) channel concat + GLN + ReLU (+ residual)
# --------------------------------------------------------------------------------------
def _make_pw_fused_kernel(n_parts, factors, with_residual):
    def kernel(*refs):
        x_refs = refs[:n_parts]
        w_ref = refs[n_parts]                   # (n_parts, Cout, C)
        prm_ref = refs[n_parts + 1]             # (Cout, 3) = [bias, gamma, beta]
        r_ref = refs[n_parts + 2] if with_residual else None
        o_ref = refs[-1]
        prm = prm_ref[...]
        y = prm[:, 0:1]                         # bias, broadcast over T
        for i, f in enumerate(factors):
            part = jnp.dot(w_ref[i], x_refs[i][0], preferred_element_type=jnp.float32)
            y = y + _upsample_nearest(part, f)
        y = jnp.maximum(_gln_fold(y, prm[:, 1:2], prm[:, 2:3]), 0.0)
        if with_residual:
            y = y + r_ref[0]
        o_ref[0] = y
    return kernel


def _make_pw_pass1_kernel(n_parts, factors, t_tile):
    """Pass 1: split-W conv (+ fused upsample) + per-sample sum / sum-of-squares.

    Grid = (B, T // t_tile); the T axis is a reduction for the stats output ("arbitrary"),
    the un-normalised y tile is written out for pass 2.
    """
    def kernel(*refs):
        x_refs = refs[:n_parts]
        w_ref = refs[n_parts]
        prm_ref = refs[n_parts + 1]
        y_ref, stats_ref = refs[n_parts + 2], refs[n_parts + 3]
        t = pl.program_id(1)
        y = prm_ref[:, 0:1]                                   # bias
        for i, f in enumerate(factors):
            if f == 1:
                xs = x_refs[i][0]                             # (C, t_tile)
            else:
                cols = t_tile // f
                start = pl.multiple_of(t * cols, cols)
                xs = x_refs[i][0, :, pl.ds(start, cols)]      # (C, t_tile // f)
            part = jnp.dot(w_ref[i], xs, preferred_element_type=jnp.float32)
            y = y + _upsample_nearest(part, f)
        y_ref[0] = y
        stats = jnp.concatenate(
            [jnp.sum(y, axis=-1, keepdims=True),
             jnp.sum(y * y, axis=-1, keepdims=True)], axis=-1)  # (Cout, 2)

        @pl.when(t == 0)
        def _init():
            stats_ref[0] = stats

        @pl.when(t != 0)
        def _acc():
            stats_ref[0] = stats_ref[0] + stats
    return kernel


def _make_pw_pass2_kernel(n_elems, with_residual):
    """Pass 2: folded GLN scale/shift + ReLU (+ residual) on a fully parallel (B, T-tile) grid."""
    def kernel(*refs):
        y_ref, stats_ref, prm_ref = refs[0], refs[1], refs[2]
        r_ref = refs[3] if with_residual else None
        o_ref = refs[-1]
        st = stats_ref[0]                                     # (Cout, 2)
        inv_n = 1.0 / n_elems
        mean = jnp.sum(st[:, 0:1]) * inv_n
        var = jnp.maximum(jnp.sum(st[:, 1:2]) * inv_n - mean * mean, 0.0)
        scale = prm_ref[:, 1:2] * jax.lax.rsqrt(var + EPS)    # (Cout, 1)
        shift = prm_ref[:, 2:3] - mean * scale
        y = jnp.maximum(y_ref[0] * scale + shift, 0.0)
        if with_residual:
            y = y + r_ref[0]
        o_ref[0] = y
    return kernel


def _pick_t_tile(T, factors):
    cand = 512
    while cand >= 128:
        if T % cand == 0 and all(cand % f == 0 for f in factors):
            return cand
        cand //= 2
    return T


def pwconv_gln_relu_pallas(parts, factors, w, bias, gamma, beta, residual=None, t_tile=None):
    """1x1 ConvBlock over a channel concat that is never materialised in HBM.

    parts[i]: (B, C, T // factors[i]); W column order == concat order
    ([bottom_up, lateral, top_down] or [right_0..right_{n-1}]).
    """
    n = len(parts)
    assert n == len(factors) and n >= 1
    B, C, _ = parts[0].shape
    T = parts[0].shape[-1] * factors[0]
    Cout = w.shape[0]
    assert w.shape[1] == n * C, (w.shape, n, C)
    for p, f in zip(parts, factors):
        assert p.shape == (B, C, T // f), (p.shape, f, T)
    with_res = residual is not None

    # split W along its input-channel axis -> one (Cout, C) slice per part
    w_stk = jnp.stack([w[:, i * C:(i + 1) * C] for i in range(n)], axis=0).astype(_F32)
    prm = jnp.stack([bias, gamma, beta], axis=1).astype(_F32)              # (Cout, 3)

    fused_floats = (sum(C * (T // f) for f in factors) + n * Cout * C + 3 * Cout
                    + (2 + int(with_res)) * Cout * T)
    if t_tile is None:
        t_tile = T if 8 * fused_floats <= _FUSED_BYTES_BUDGET else _pick_t_tile(T, factors)

    if t_tile >= T:
        # ---------------- fused single-pass path: conv + GLN + ReLU in one kernel ----------
        in_specs = [pl.BlockSpec((1, C, T // f), lambda b: (b, 0, 0)) for f in factors]
        args = list(parts)
        in_specs += [pl.BlockSpec((n, Cout, C), lambda b: (0, 0, 0)),
                     pl.BlockSpec((Cout, 3), lambda b: (0, 0))]
        args += [w_stk, prm]
        if with_res:
            in_specs.append(pl.BlockSpec((1, Cout, T), lambda b: (b, 0, 0)))
            args.append(residual)
        return pl.pallas_call(
            _make_pw_fused_kernel(n, tuple(factors), with_res),
            out_shape=jax.ShapeDtypeStruct((B, Cout, T), _F32),
            grid=(B,),
            in_specs=in_specs,
            out_specs=pl.BlockSpec((1, Cout, T), lambda b: (b, 0, 0)),
            compiler_params=_compiler_params(fused_floats, ("parallel",)),
        )(*args)

    # ---------------- two-pass T-tiled path (production-size T) ---------------------------
    assert T % t_tile == 0 and t_tile % 128 == 0, (T, t_tile)
    assert all(t_tile % f == 0 for f in factors), (t_tile, factors)
    n_t = T // t_tile

    def part_spec(f, ti):
        if f == 1:
            return pl.BlockSpec((1, C, t_tile), lambda b, t: (b, 0, t))
        # low-res parts (<= T/2 columns) stay resident per sample and are sliced in-kernel
        return pl.BlockSpec((1, C, ti), lambda b, t: (b, 0, 0))

    p1_specs = [part_spec(f, T // f) for f in factors]
    p1_specs += [pl.BlockSpec((n, Cout, C), lambda b, t: (0, 0, 0)),
                 pl.BlockSpec((Cout, 3), lambda b, t: (0, 0))]
    p1_floats = (sum(C * (t_tile if f == 1 else T // f) for f in factors)
                 + n * Cout * C + 3 * Cout + Cout * t_tile + 2 * Cout)
    y_un, stats = pl.pallas_call(
        _make_pw_pass1_kernel(n, tuple(factors), t_tile),
        out_shape=(jax.ShapeDtypeStruct((B, Cout, T), _F32),
                   jax.ShapeDtypeStruct((B, Cout, 2), _F32)),
        grid=(B, n_t),
        in_specs=p1_specs,
        out_specs=(pl.BlockSpec((1, Cout, t_tile), lambda b, t: (b, 0, t)),
                   pl.BlockSpec((1, Cout, 2), lambda b, t: (b, 0, 0))),
        compiler_params=_compiler_params(p1_floats, ("parallel", "arbitrary")),
    )(*parts, w_stk, prm)

    p2_specs = [pl.BlockSpec((1, Cout, t_tile), lambda b, t: (b, 0, t)),
                pl.BlockSpec((1, Cout, 2), lambda b, t: (b, 0, 0)),
                pl.BlockSpec((Cout, 3), lambda b, t: (0, 0))]
    args2 = [y_un, stats, prm]
    if with_res:
        p2_specs.append(pl.BlockSpec((1, Cout, t_tile), lambda b, t: (b, 0, t)))
        args2.append(residual)
    p2_floats = (3 + int(with_res)) * Cout * t_tile + 2 * Cout + 3 * Cout
    return pl.pallas_call(
        _make_pw_pass2_kernel(Cout * T, with_res),
        out_shape=jax.ShapeDtypeStruct((B, Cout, T), _F32),
        grid=(B, n_t),
        in_specs=p2_specs,
        out_specs=pl.BlockSpec((1, Cout, t_tile), lambda b, t: (b, 0, t)),
        compiler_params=_compiler_params(p2_floats, ("parallel", "parallel")),
    )(*args2)


# --------------------------------------------------------------------------------------
# FRCNN block forward (structure shared by the Pallas path and the pure-JAX reference)
# --------------------------------------------------------------------------------------
def frcnn_forward(x, params, dw_fn, pw_fn):
    stage_num = len(params["initial"]) + 1
    assert x.shape[-1] % (2 ** (stage_num - 1)) == 0, "seq_len must be divisible by 2^(stages-1)"
    residual = x
    left = [x]
    for i in range(stage_num - 1):
        left.append(dw_fn(left[-1], *params["initial"][i]))
    right = []
    for i in range(stage_num):
        parts, factors = [], []
        if i > 0:                                 # bottom-up: stride-2 conv of left[i-1]
            parts.append(dw_fn(left[i - 1], *params["bottom_up"][i - 1]))
            factors.append(1)
        parts.append(left[i])                     # lateral
        factors.append(1)
        if i + 1 < stage_num:                     # top-down: nearest x2 upsample of left[i+1]
            parts.append(left[i + 1])
            factors.append(2)
        w, b, g, bt = params["inter"][i]
        right.append(pw_fn(parts, factors, w, b, g, bt))
    T0 = right[0].shape[-1]
    factors = [T0 // r.shape[-1] for r in right]  # nearest upsample of every node to T0
    w, b, g, bt = params["final"]
    return pw_fn(right, factors, w, b, g, bt, residual=residual)


# --------------------------------------------------------------------------------------
# Pure-JAX reference ConvBlocks (correctness check)
# --------------------------------------------------------------------------------------
def _gln_ref(y, gamma, beta):
    mean = jnp.mean(y, axis=(1, 2), keepdims=True)
    var = jnp.mean((y - mean) ** 2, axis=(1, 2), keepdims=True)
    return gamma[None, :, None] * (y - mean) * jax.lax.rsqrt(var + EPS) + beta[None, :, None]


def dwconv_gln_ref(x, w, bias, gamma, beta):
    B, C, T = x.shape
    To = T // 2
    xp = jnp.pad(x, ((0, 0), (0, 0), (2, 2)))
    y = bias[None, :, None]
    for k in range(5):
        y = y + w[None, :, k:k + 1] * xp[:, :, k:k + 2 * To:2]
    return _gln_ref(y, gamma, beta)


def pwconv_gln_relu_ref(parts, factors, w, bias, gamma, beta, residual=None):
    full = [jnp.repeat(p, f, axis=-1) if f > 1 else p for p, f in zip(parts, factors)]
    x = jnp.concatenate(full, axis=1)
    y = jnp.einsum("oc,bct->bot", w, x) + bias[None, :, None]
    y = jnp.maximum(_gln_ref(y, gamma, beta), 0.0)
    if residual is not None:
        y = y + residual
    return y


# --------------------------------------------------------------------------------------
# Deterministic parameter init + demo
# --------------------------------------------------------------------------------------
def init_params(key, conv_dim, stage_num, kernel_size):
    keys = iter(jax.random.split(key, 256))
    nxt = lambda: next(keys)

    def dw_params():
        return (0.2 * jax.random.normal(nxt(), (conv_dim, kernel_size), _F32),
                0.1 * jax.random.normal(nxt(), (conv_dim,), _F32),
                1.0 + 0.1 * jax.random.normal(nxt(), (conv_dim,), _F32),
                0.1 * jax.random.normal(nxt(), (conv_dim,), _F32))

    def pw_params(cin):
        return (0.2 * jax.random.normal(nxt(), (conv_dim, cin), _F32),
                0.1 * jax.random.normal(nxt(), (conv_dim,), _F32),
                1.0 + 0.1 * jax.random.normal(nxt(), (conv_dim,), _F32),
                0.1 * jax.random.normal(nxt(), (conv_dim,), _F32))

    return {
        "initial": [dw_params() for _ in range(stage_num - 1)],
        "bottom_up": [dw_params() for _ in range(stage_num - 1)],
        "inter": [pw_params(2 * conv_dim if (i == 0 or i == stage_num - 1) else 3 * conv_dim)
                  for i in range(stage_num)],
        "final": pw_params(stage_num * conv_dim),
    }


if __name__ == "__main__":
    kernel_size = 5
    configs = [
        # (B, C, T, stage_num, t_tile)
        (2, 16, 32, 4, None),   # fused single-pass path (whole (C, T) tile per sample)
        (2, 8, 256, 3, 128),    # T-tiled two-pass-GLN path (production-style pipeline)
    ]
    for B, C, T, stage_num, t_tile in configs:
        root = jax.random.PRNGKey(0)
        kp, kx = jax.random.split(root)
        params = init_params(kp, C, stage_num, kernel_size)
        x = 0.5 * jax.random.normal(kx, (B, C, T), _F32)

        pw = functools.partial(pwconv_gln_relu_pallas, t_tile=t_tile)
        out = frcnn_forward(x, params, dwconv_gln_pallas, pw)
        out = jax.block_until_ready(out)
        assert out.shape == (B, C, T)

        ref = frcnn_forward(x, params, dwconv_gln_ref, pwconv_gln_relu_ref)
        np.testing.assert_allclose(np.asarray(out), np.asarray(ref), atol=5e-3, rtol=5e-3)

    print("KERNEL_OK")
</pallas_src>

<mosaic_0001>
module attributes {stable_mosaic.version = 11 : i64} {
  func.func @k(%arg0: memref<8x128xf32, #tpu.memory_space<vmem>>, %arg1: memref<8x128xf32, #tpu.memory_space<vmem>>) attributes {dimension_semantics = [], scalar_prefetch = 0 : i64, scratch_operands = 0 : i64, tpu.core_type = #tpu.core_type<tc>} {
    %c0 = arith.constant 0 : index
    %c0_0 = arith.constant 0 : index
    %0 = vector.load %arg0[%c0, %c0_0] : memref<8x128xf32, #tpu.memory_space<vmem>>, vector<8x128xf32>
    %c1_i32 = arith.constant 1 : i32
    %1 = tpu.dynamic_rotate %0 by %c1_i32 dim 1 : vector<8x128xf32>, i32 -> vector<8x128xf32>
    %c0_1 = arith.constant 0 : index
    %c0_2 = arith.constant 0 : index
    %2 = vector.load %arg1[%c0_1, %c0_2] : memref<8x128xf32, #tpu.memory_space<vmem>>, vector<8x128xf32>
    tpu.vector_store %arg1[%c0_1, %c0_2], %1 {strides = array<i32>} : memref<8x128xf32, #tpu.memory_space<vmem>>, vector<8x128xf32>,
    return
  }
}

module attributes {stable_mosaic.version = 11 : i64} {
  func.func @_dwconv_gln_kernel(%arg0: i32, %arg1: memref<1x16x16xf32, #tpu.memory_space<vmem>>, %arg2: memref<1x16x16xf32, #tpu.memory_space<vmem>>, %arg3: memref<16x8xf32, #tpu.memory_space<vmem>>, %arg4: memref<1x16x16xf32, #tpu.memory_space<vmem>>) attributes {dimension_semantics = [#tpu.dimension_semantics<parallel>], iteration_bounds = array<i64: 2>, scalar_prefetch = 0 : i64, scratch_operands = 0 : i64, tpu.core_type = #tpu.core_type<tc>, window_params = [{transform_indices = @transform_0, window_bounds = array<i64: 1, 16, 16>}, {transform_indices = @transform_1, window_bounds = array<i64: 1, 16, 16>}, {pipeline_mode = #tpu.pipeline_mode<synchronous>, transform_indices = @transform_2, window_bounds = array<i64: 16, 8>}, {transform_indices = @transform_3, window_bounds = array<i64: 1, 16, 16>}]} {
    %c0 = arith.constant 0 : index
    %c0_0 = arith.constant 0 : index
    %c0_1 = arith.constant 0 : index
    %0 = vector.load %arg1[%c0, %c0_0, %c0_1] : memref<1x16x16xf32, #tpu.memory_space<vmem>>, vector<1x16x16xf32>
    %1 = vector.shape_cast %0 : vector<1x16x16xf32> to vector<16x16xf32>
    %c0_2 = arith.constant 0 : index
    %c0_3 = arith.constant 0 : index
    %c0_4 = arith.constant 0 : index
    %2 = vector.load %arg2[%c0_2, %c0_3, %c0_4] : memref<1x16x16xf32, #tpu.memory_space<vmem>>, vector<1x16x16xf32>
    %3 = vector.shape_cast %2 : vector<1x16x16xf32> to vector<16x16xf32>
    %c0_5 = arith.constant 0 : index
    %c0_6 = arith.constant 0 : index
    %4 = vector.load %arg3[%c0_5, %c0_6] : memref<16x8xf32, #tpu.memory_space<vmem>>, vector<16x8xf32>
    %5 = vector.extract_strided_slice %4 {offsets = [0, 0], sizes = [16, 1], strides = [1, 1]} : vector<16x8xf32> to vector<16x1xf32>
    %cst = arith.constant 0.000000e+00 : f32
    %6 = vector.broadcast %cst : f32 to vector<16x1xf32>
    %7 = vector.extract_strided_slice %1 {offsets = [0, 0], sizes = [16, 15], strides = [1, 1]} : vector<16x16xf32> to vector<16x15xf32>
    %8 = tpu.concatenate %6, %7 in 1 : vector<16x1xf32>, vector<16x15xf32> -> vector<16x16xf32>
    %9 = vector.broadcast %5 : vector<16x1xf32> to vector<16x16xf32>
    %10 = arith.mulf %9, %8 : vector<16x16xf32>
    %11 = vector.extract_strided_slice %4 {offsets = [0, 1], sizes = [16, 1], strides = [1, 1]} : vector<16x8xf32> to vector<16x1xf32>
    %cst_7 = arith.constant 0.000000e+00 : f32
    %12 = vector.broadcast %cst_7 : f32 to vector<16x1xf32>
    %13 = vector.extract_strided_slice %3 {offsets = [0, 0], sizes = [16, 15], strides = [1, 1]} : vector<16x16xf32> to vector<16x15xf32>
    %14 = tpu.concatenate %12, %13 in 1 : vector<16x1xf32>, vector<16x15xf32> -> vector<16x16xf32>
    %15 = vector.broadcast %11 : vector<16x1xf32> to vector<16x16xf32>
    %16 = arith.mulf %15, %14 : vector<16x16xf32>
    %17 = arith.addf %10, %16 : vector<16x16xf32>
    %18 = vector.extract_strided_slice %4 {offsets = [0, 2], sizes = [16, 1], strides = [1, 1]} : vector<16x8xf32> to vector<16x1xf32>
    %19 = vector.broadcast %18 : vector<16x1xf32> to vector<16x16xf32>
    %20 = arith.mulf %19, %1 : vector<16x16xf32>
    %21 = arith.addf %17, %20 : vector<16x16xf32>
    %22 = vector.extract_strided_slice %4 {offsets = [0, 3], sizes = [16, 1], strides = [1, 1]} : vector<16x8xf32> to vector<16x1xf32>
    %23 = vector.broadcast %22 : vector<16x1xf32> to vector<16x16xf32>
    %24 = arith.mulf %23, %3 : vector<16x16xf32>
    %25 = arith.addf %21, %24 : vector<16x16xf32>
    %26 = vector.extract_strided_slice %4 {offsets = [0, 4], sizes = [16, 1], strides = [1, 1]} : vector<16x8xf32> to vector<16x1xf32>
    %cst_8 = arith.constant 0.000000e+00 : f32
    %27 = vector.broadcast %cst_8 : f32 to vector<16x1xf32>
    %28 = vector.extract_strided_slice %1 {offsets = [0, 1], sizes = [16, 15], strides = [1, 1]} : vector<16x16xf32> to vector<16x15xf32>
    %29 = tpu.concatenate %28, %27 in 1 : vector<16x15xf32>, vector<16x1xf32> -> vector<16x16xf32>
    %30 = vector.broadcast %26 : vector<16x1xf32> to vector<16x16xf32>
    %31 = arith.mulf %30, %29 : vector<16x16xf32>
    %32 = arith.addf %25, %31 : vector<16x16xf32>
    %33 = vector.extract_strided_slice %4 {offsets = [0, 5], sizes = [16, 1], strides = [1, 1]} : vector<16x8xf32> to vector<16x1xf32>
    %34 = vector.broadcast %33 : vector<16x1xf32> to vector<16x16xf32>
    %35 = arith.addf %32, %34 : vector<16x16xf32>
    %36 = vector.extract_strided_slice %4 {offsets = [0, 6], sizes = [16, 1], strides = [1, 1]} : vector<16x8xf32> to vector<16x1xf32>
    %37 = vector.extract_strided_slice %4 {offsets = [0, 7], sizes = [16, 1], strides = [1, 1]} : vector<16x8xf32> to vector<16x1xf32>
    %38 = vector.shape_cast %35 : vector<16x16xf32> to vector<1x16x16xf32>
    %cst_9 = arith.constant dense<0.000000e+00> : vector<1xf32>
    %39 = vector.multi_reduction <add>, %38, %cst_9 [1, 2] : vector<1x16x16xf32> to vector<1xf32>
    %40 = vector.shape_cast %39 : vector<1xf32> to vector<1x1x1xf32>
    %41 = vector.extract %40[0, 0, 0] : f32 from vector<1x1x1xf32>
    %cst_10 = arith.constant 3.906250e-03 : f32
    %42 = arith.mulf %41, %cst_10 : f32
    %43 = arith.mulf %35, %35 : vector<16x16xf32>
    %44 = vector.shape_cast %43 : vector<16x16xf32> to vector<1x16x16xf32>
    %cst_11 = arith.constant dense<0.000000e+00> : vector<1xf32>
    %45 = vector.multi_reduction <add>, %44, %cst_11 [1, 2] : vector<1x16x16xf32> to vector<1xf32>
    %46 = vector.shape_cast %45 : vector<1xf32> to vector<1x1x1xf32>
    %47 = vector.extract %46[0, 0, 0] : f32 from vector<1x1x1xf32>
    %cst_12 = arith.constant 3.906250e-03 : f32
    %48 = arith.mulf %47, %cst_12 : f32
    %49 = arith.mulf %42, %42 : f32
    %50 = arith.subf %48, %49 : f32
    %cst_13 = arith.constant 0.000000e+00 : f32
    %51 = arith.maximumf %50, %cst_13 : f32
    %cst_14 = arith.constant 9.99999993E-9 : f32
    %52 = arith.addf %51, %cst_14 : f32
    %53 = math.rsqrt %52 : f32
    %54 = vector.broadcast %53 : f32 to vector<16x1xf32>
    %55 = arith.mulf %36, %54 : vector<16x1xf32>
    %56 = vector.broadcast %42 : f32 to vector<16x1xf32>
    %57 = arith.mulf %56, %55 : vector<16x1xf32>
    %58 = arith.subf %37, %57 : vector<16x1xf32>
    %59 = vector.broadcast %55 : vector<16x1xf32> to vector<16x16xf32>
    %60 = arith.mulf %35, %59 : vector<16x16xf32>
    %61 = vector.broadcast %58 : vector<16x1xf32> to vector<16x16xf32>
    %62 = arith.addf %60, %61 : vector<16x16xf32>
    %c0_15 = arith.constant 0 : index
    %c0_16 = arith.constant 0 : index
    %c0_17 = arith.constant 0 : index
    %63 = vector.load %arg4[%c0_15, %c0_16, %c0_17] : memref<1x16x16xf32, #tpu.memory_space<vmem>>, vector<1x16x16xf32>
    %64 = vector.shape_cast %63 : vector<1x16x16xf32> to vector<16x16xf32>
    %65 = vector.shape_cast %62 : vector<16x16xf32> to vector<1x16x16xf32>
    tpu.vector_store %arg4[%c0_15, %c0_16, %c0_17], %65 {strides = array<i32>} : memref<1x16x16xf32, #tpu.memory_space<vmem>>, vector<1x16x16xf32>,
    return
  }
  func.func @transform_0(%arg0: i32) -> (i32, i32, i32) {
    %c0_i32 = arith.constant 0 : i32
    %c0_i32_0 = arith.constant 0 : i32
    %c0_i32_1 = arith.constant 0 : i32
    return %arg0, %c0_i32, %c0_i32_0 : i32, i32, i32
  }
  func.func @transform_1(%arg0: i32) -> (i32, i32, i32) {
    %c0_i32 = arith.constant 0 : i32
    %c0_i32_0 = arith.constant 0 : i32
    %c0_i32_1 = arith.constant 0 : i32
    return %arg0, %c0_i32, %c0_i32_0 : i32, i32, i32
  }
  func.func @transform_2(%arg0: i32) -> (i32, i32) {
    %c0_i32 = arith.constant 0 : i32
    %c0_i32_0 = arith.constant 0 : i32
    %c0_i32_1 = arith.constant 0 : i32
    return %c0_i32, %c0_i32_0 : i32, i32
  }
  func.func @transform_3(%arg0: i32) -> (i32, i32, i32) {
    %c0_i32 = arith.constant 0 : i32
    %c0_i32_0 = arith.constant 0 : i32
    %c0_i32_1 = arith.constant 0 : i32
    return %arg0, %c0_i32, %c0_i32_0 : i32, i32, i32
  }
}

</mosaic_0001>

<llo_original>
// kernel: tpu_custom_call.1
$region0: #{tpu_custom_call.1}
  #allocation0 [shape = 'u32[]', space=smem, size = 0x4, offset = 0x4, fixed_abs, tag = 'smem constant byte address 0x4 - core index']
  #allocation1 [shape = 'u32[72,128]{1,0:T(1,128)}', space=vmem, size = 0x9000, scoped, tag = 'internal scratch']
  %s0 = inlined_call_operand.hbm [shape: f32[8,128], index: 0, kind: input, shape index: {}]
  %s1 = inlined_call_operand.hbm [shape: f32[8,128], index: 1, kind: output, shape index: {}]
  %s2 = sld [smem:[#allocation0]]
  $region18: #{tpu_custom_call.1} parent=0
    _
  %s4 = ssub.s32 1, %s2
  %s5 = scalar_select 0, %s4, %s2
  $region1: #{tpu_custom_call.1} parent=0
    #allocation2 [shape = 'u8[4096]{0}', space=vmem, size = 0x1000, scoped, tag = 'input window, operand 0, single buffered']
    #allocation3 [shape = 's32[1]{0}', space=sflag, size = 0x4, scoped, tag = 'scoped memory for tpu_custom_call.1']
    #allocation4 [shape = 's32[1]{0}', space=sflag, size = 0x4, scoped, tag = 'scoped memory for tpu_custom_call.1']
    #allocation5 [shape = 'u8[4096]{0}', space=vmem, size = 0x1000, scoped, tag = 'output window, operand 0, single buffered']
    %6 = vsyncpa [#allocation3], 0
    %7 = vsyncpa [#allocation4], 0
    // Predicated region
    $region2: #{tpu_custom_call.1} parent=1 // pred_check
      _
    $region3: #{tpu_custom_call.1} parent=1 // pred_check_branch
      %9 = sbr.rel (0) target = $region5
    $region4: #{tpu_custom_call.1} parent=1 // pred_region
      %11 = vsyncadd [#allocation3], 0
      %s13 = sshll.u32 %s0, 4
      %s14 = int_to_ptr.hbm [resolvable:$true] %s13
      %s15 = sshll.u32 [#allocation2], 4
      %s16 = int_to_ptr.vmem [resolvable:$true] %s15
      %18 = dma.hbm_to_vmem [thread:$0]  %s14, 128, %s16, [#allocation3]
    $region5: #{tpu_custom_call.1} parent=1 // pred_fallthru
      _
    // Predicated region
    $region6: #{tpu_custom_call.1} parent=1 // pred_check
      _
    $region7: #{tpu_custom_call.1} parent=1 // pred_check_branch
      %20 = sbr.rel (0) target = $region9
    $region8: #{tpu_custom_call.1} parent=1 // pred_region
      %22 = dma.done [#allocation3], 128
    $region9: #{tpu_custom_call.1} parent=1 // pred_fallthru
      _
    %v23 = vld [vmem:[#allocation2] sm:$0xff]
    %24 = vrot.lane.b32.xlu0 %v23, 1
    %v25 = vpop.permute.xlu0 %24
    %26 = vst [vmem:[#allocation5] sm:$0xff] %v25
    // Predicated region
    $region10: #{tpu_custom_call.1} parent=1 // pred_check
      _
    $region11: #{tpu_custom_call.1} parent=1 // pred_check_branch
      %28 = sbr.rel (0) target = $region13
    $region12: #{tpu_custom_call.1} parent=1 // pred_region
      %30 = vsyncadd [#allocation4], 0
      %s32 = sshll.u32 [#allocation5], 4
      %s33 = int_to_ptr.vmem [resolvable:$true] %s32
      %s34 = sshll.u32 %s1, 4
      %s35 = int_to_ptr.hbm [resolvable:$true] %s34
      %37 = dma.vmem_to_hbm [thread:$0]  %s33, 128, %s35, [#allocation4]
    $region13: #{tpu_custom_call.1} parent=1 // pred_fallthru
      _
    // Predicated region
    $region14: #{tpu_custom_call.1} parent=1 // pred_check
      _
    $region15: #{tpu_custom_call.1} parent=1 // pred_check_branch
      %39 = sbr.rel (0) target = $region17
    $region16: #{tpu_custom_call.1} parent=1 // pred_region
      %41 = dma.done [#allocation4], 128
    $region17: #{tpu_custom_call.1} parent=1 // pred_fallthru
      _
    %42 = vsyncpa [#allocation3], 1
    %43 = vsyncpa [#allocation4], 1

// kernel: tpu_custom_call.1
$region0: #{tpu_custom_call.1}
  #allocation0 [shape = 'u32[]', space=smem, size = 0x4, offset = 0x4, fixed_abs, tag = 'smem constant byte address 0x4 - core index']
  #allocation1 [shape = 'u32[72,128]{1,0:T(1,128)}', space=vmem, size = 0x9000, scoped, tag = 'internal scratch']
  %s0 = inlined_call_operand.hbm [shape: f32[2,16,16], index: 0, kind: input, shape index: {}]
  %s1 = inlined_call_operand.hbm [shape: f32[2,16,16], index: 1, kind: input, shape index: {}]
  %s2 = inlined_call_operand.vmem [shape: f32[16,8], index: 2, kind: input, shape index: {}]
  %s3 = inlined_call_operand.hbm [shape: f32[2,16,16], index: 3, kind: output, shape index: {}]
  %s4 = sld [smem:[#allocation0]]
  $region53: #{tpu_custom_call.1} parent=0
    _
  %s6 = ssub.s32 1, %s4
  %s7 = scalar_select 0, %s6, %s4
  $region1: #{tpu_custom_call.1} parent=0
    #allocation2 [shape = 'u8[16384]{0}', space=vmem, size = 0x4000, scoped, tag = 'input window, operand 0']
    #allocation3 [shape = 's32[2]{0}', space=sflag, size = 0x8, scoped, tag = 'scoped memory for tpu_custom_call.1']
    #allocation4 [shape = 's32[2]{0}', space=sflag, size = 0x8, scoped, tag = 'scoped memory for tpu_custom_call.1']
    #allocation5 [shape = 'u8[16384]{0}', space=vmem, size = 0x4000, scoped, tag = 'input window, operand 1']
    #allocation6 [shape = 's32[2]{0}', space=sflag, size = 0x8, scoped, tag = 'scoped memory for tpu_custom_call.1']
    #allocation7 [shape = 'u8[16384]{0}', space=vmem, size = 0x4000, scoped, tag = 'output window, operand 0']
    %8 = vsyncpa [#allocation3], 0
    %s9 = scalar_lea.sflag [#allocation3], 1
    %10 = vsyncpa %s9, 0
    %11 = vsyncpa [#allocation6], 0
    %s12 = scalar_lea.sflag [#allocation6], 1
    %13 = vsyncpa %s12, 0
    %14 = vsyncpa [#allocation4], 0
    %s15 = scalar_lea.sflag [#allocation4], 1
    %16 = vsyncpa %s15, 0
    loop: start=0, step=1, limit=4
    $region2: #{tpu_custom_call.1} parent=1 // loop_pre_header
      _
    $region3: #{tpu_custom_call.1} parent=1 // loop_header
      %s18 = sphi 0, %s22
      %p19 = scmp.ge.s32.totalorder %s18, 4
      %s28 = sphi 0, %s30
      %s31 = sphi 0, %s28
      %s32 = sphi 0, %s31
      %s48 = sphi 0, %s32
      %s54 = sphi 0, %s56
      %s57 = sphi 0, %s54
      %s58 = sphi 0, %s57
      %s74 = sphi 0, %s58
      %s78 = sphi 0, %s78
      %s80 = sphi 0, %s78
      %s81 = sphi 0, %s80
      %s95 = sphi 0, %s81
      %s101 = sphi 0, %s103
      %s104 = sphi 0, %s101
      %s105 = sphi 0, %s104
      %s121 = sphi 0, %s105
    $region4: #{tpu_custom_call.1} parent=1 // loop_header_branch
      %21 = sbr.rel (%p19) target = $region8
    $region5: #{tpu_custom_call.1} parent=1 // loop_body
      %s23 = ssub.s32 %s18, 1
      %s24 = ssub.s32 %s18, 2
      %s25 = sadd.s32 %s18, 1
      %s26 = ssub.s32 %s18, %s25
      %p27 = scmp.eq.s32.totalorder %s26, 0
      %s29 = sadd.s32 %s28, 1
      %s30 = scalar_select %p27, %s28, %s29
      %p33 = pneg %p27
      %p34 = scmp.eq.s32.totalorder %s18, 1
      %p35 = por %p33, %p34
      %p36 = scmp.ne.s32.totalorder %s28, %s31
      %p37 = scmp.eq.s32.totalorder %s18, 0
      %p38 = por %p36, %p37
      %p39 = scmp.ne.s32.totalorder %s28, %s31
      %p40 = scmp.eq.s32.totalorder %s23, 1
      %p41 = por %p39, %p40
      %p42 = scmp.ne.s32.totalorder %s31, %s32
      %p43 = scmp.eq.s32.totalorder %s23, 0
      %p44 = por %p42, %p43
      %p45 = scmp.ne.s32.totalorder %s31, %s32
      %p46 = scmp.eq.s32.totalorder %s24, 1
      %p47 = por %p45, %p46
      %p49 = scmp.ne.s32.totalorder %s32, %s48
      %p50 = scmp.eq.s32.totalorder %s24, 0
      %p51 = por %p49, %p50
      %s52 = ssub.s32 %s18, %s25
      %p53 = scmp.eq.s32.totalorder %s52, 0
      %s55 = sadd.s32 %s54, 1
      %s56 = scalar_select %p53, %s54, %s55
      %p59 = pneg %p53
      %p60 = scmp.eq.s32.totalorder %s18, 1
      %p61 = por %p59, %p60
      %p62 = scmp.ne.s32.totalorder %s54, %s57
      %p63 = scmp.eq.s32.totalorder %s18, 0
      %p64 = por %p62, %p63
      %p65 = scmp.ne.s32.totalorder %s54, %s57
      %p66 = scmp.eq.s32.totalorder %s23, 1
      %p67 = por %p65, %p66
      %p68 = scmp.ne.s32.totalorder %s57, %s58
      %p69 = scmp.eq.s32.totalorder %s23, 0
      %p70 = por %p68, %p69
      %p71 = scmp.ne.s32.totalorder %s57, %s58
      %p72 = scmp.eq.s32.totalorder %s24, 1
      %p73 = por %p71, %p72
      %p75 = scmp.ne.s32.totalorder %s58, %s74
      %p76 = scmp.eq.s32.totalorder %s24, 0
      %p77 = por %p75, %p76
      %s79 = sadd.s32 %s78, 1
      %p82 = scmp.eq.s32.totalorder %s18, 1
      %p83 = scmp.ne.s32.totalorder %s78, %s80
      %p84 = scmp.eq.s32.totalorder %s18, 0
      %p85 = por %p83, %p84
      %p86 = scmp.ne.s32.totalorder %s78, %s80
      %p87 = scmp.eq.s32.totalorder %s23, 1
      %p88 = por %p86, %p87
      %p89 = scmp.ne.s32.totalorder %s80, %s81
      %p90 = scmp.eq.s32.totalorder %s23, 0
      %p91 = por %p89, %p90
      %p92 = scmp.ne.s32.totalorder %s80, %s81
      %p93 = scmp.eq.s32.totalorder %s24, 1
      %p94 = por %p92, %p93
      %p96 = scmp.ne.s32.totalorder %s81, %s95
      %p97 = scmp.eq.s32.totalorder %s24, 0
      %p98 = por %p96, %p97
      %s99 = ssub.s32 %s18, %s25
      %p100 = scmp.eq.s32.totalorder %s99, 0
      %s102 = sadd.s32 %s101, 1
      %s103 = scalar_select %p100, %s101, %s102
      %p106 = pneg %p100
      %p107 = scmp.eq.s32.totalorder %s18, 1
      %p108 = por %p106, %p107
      %p109 = scmp.ne.s32.totalorder %s101, %s104
      %p110 = scmp.eq.s32.totalorder %s18, 0
      %p111 = por %p109, %p110
      %p112 = scmp.ne.s32.totalorder %s101, %s104
      %p113 = scmp.eq.s32.totalorder %s23, 1
      %p114 = por %p112, %p113
      %p115 = scmp.ne.s32.totalorder %s104, %s105
      %p116 = scmp.eq.s32.totalorder %s23, 0
      %p117 = por %p115, %p116
      %p118 = scmp.ne.s32.totalorder %s104, %s105
      %p119 = scmp.eq.s32.totalorder %s24, 1
      %p120 = por %p118, %p119
      %p122 = scmp.ne.s32.totalorder %s105, %s121
      %p123 = scmp.eq.s32.totalorder %s24, 0
      %p124 = por %p122, %p123
      %p125 = scmp.le.s32.totalorder 1, %s18
      %p126 = scmp.lt.s32.totalorder %s18, 3
      %p127 = pnand %p125, %p126
      %p128 = pneg %p127
      // Predicated region
      $region9: #{tpu_custom_call.1} parent=5 // pred_check
        _
      $region10: #{tpu_custom_call.1} parent=5 // pred_check_branch
        %130 = sbr.rel (%p127) target = $region12
      $region11: #{tpu_custom_call.1} parent=5 // pred_region
        %s131 = ssub.s32 %s18, 1
        // Predicated region
        $region13: #{tpu_custom_call.1} parent=11 // pred_check
          %p132 = pneg %p91
        $region14: #{tpu_custom_call.1} parent=11 // pred_check_branch
          %134 = sbr.rel (%p132) target = $region16
        $region15: #{tpu_custom_call.1} parent=11 // pred_region
          _
        $region16: #{tpu_custom_call.1} parent=11 // pred_fallthru
          _
      $region12: #{tpu_custom_call.1} parent=5 // pred_fallthru
        _
      %p135 = scmp.lt.s32.totalorder %s18, 2
      // Predicated region
      $region17: #{tpu_custom_call.1} parent=5 // pred_check
        %p136 = pneg %p135
      $region18: #{tpu_custom_call.1} parent=5 // pred_check_branch
        %138 = sbr.rel (%p136) target = $region20
      $region19: #{tpu_custom_call.1} parent=5 // pred_region
        // Predicated region
        $region21: #{tpu_custom_call.1} parent=19 // pred_check
          %p139 = pneg %p38
        $region22: #{tpu_custom_call.1} parent=19 // pred_check_branch
          %141 = sbr.rel (%p139) target = $region24
        $region23: #{tpu_custom_call.1} parent=19 // pred_region
          %s142 = sand.u32 %s28, 1
          %s143 = scalar_lea.sflag [#allocation3], %s142
          %s144 = sand.u32 %s28, 1
          %s145 = smul.addr %s144, 16
          %s146 = scalar_lea.vmem [#allocation2], %s145
          %148 = vsyncadd %s143, 0
          %s149 = smul.addr %s18, 2
          %s150 = smul.addr %s149, 8
          %s151 = scalar_lea.hbm %s0, %s150
          %s152 = sshll.u32 %s151, 4
          %s153 = int_to_ptr.hbm [resolvable:$true] %s152
          %s154 = sshll.u32 %s146, 4
          %s155 = int_to_ptr.vmem [resolvable:$true] %s154
          %160 = dma.hbm_to_vmem [thread:$0]  %s153, 256, %s155, %s143, 128, 128, 8
        $region24: #{tpu_custom_call.1} parent=19 // pred_fallthru
          _
        // Predicated region
        $region25: #{tpu_custom_call.1} parent=19 // pred_check
          %p161 = pneg %p64
        $region26: #{tpu_custom_call.1} parent=19 // pred_check_branch
          %163 = sbr.rel (%p161) target = $region28
        $region27: #{tpu_custom_call.1} parent=19 // pred_region
          %s164 = sand.u32 %s54, 1
          %s165 = scalar_lea.sflag [#allocation6], %s164
          %s166 = sand.u32 %s54, 1
          %s167 = smul.addr %s166, 16
          %s168 = scalar_lea.vmem [#allocation5], %s167
          %170 = vsyncadd %s165, 0
          %s171 = smul.addr %s18, 2
          %s172 = smul.addr %s171, 8
          %s173 = scalar_lea.hbm %s1, %s172
          %s174 = sshll.u32 %s173, 4
          %s175 = int_to_ptr.hbm [resolvable:$true] %s174
          %s176 = sshll.u32 %s168, 4
          %s177 = int_to_ptr.vmem [resolvable:$true] %s176
          %182 = dma.hbm_to_vmem [thread:$0]  %s175, 256, %s177, %s165, 128, 128, 8
        $region28: #{tpu_custom_call.1} parent=19 // pred_fallthru
          _
      $region20: #{tpu_custom_call.1} parent=5 // pred_fallthru
        _
      %p183 = scmp.le.s32.totalorder 1, %s18
      %p184 = scmp.lt.s32.totalorder %s18, 3
      %p185 = pnand %p183, %p184
      %p186 = pneg %p185
      // Predicated region
      $region29: #{tpu_custom_call.1} parent=5 // pred_check
        _
      $region30: #{tpu_custom_call.1} parent=5 // pred_check_branch
        %188 = sbr.rel (%p185) target = $region32
      $region31: #{tpu_custom_call.1} parent=5 // pred_region
        %s189 = ssub.s32 %s18, 1
        %s190 = sand.u32 %s31, 1
        %s191 = scalar_lea.sflag [#allocation3], %s190
        %s192 = sand.u32 %s31, 1
        %s193 = smul.addr %s192, 16
        %s194 = scalar_lea.vmem [#allocation2], %s193
        // Predicated region
        $region33: #{tpu_custom_call.1} parent=31 // pred_check
          %p195 = pneg %p44
        $region34: #{tpu_custom_call.1} parent=31 // pred_check_branch
          %197 = sbr.rel (%p195) target = $region36
        $region35: #{tpu_custom_call.1} parent=31 // pred_region
          %199 = dma.done %s191, 256
        $region36: #{tpu_custom_call.1} parent=31 // pred_fallthru
          _
        %s200 = sand.u32 %s57, 1
        %s201 = scalar_lea.sflag [#allocation6], %s200
        %s202 = sand.u32 %s57, 1
        %s203 = smul.addr %s202, 16
        %s204 = scalar_lea.vmem [#allocation5], %s203
        // Predicated region
        $region37: #{tpu_custom_call.1} parent=31 // pred_check
          %p205 = pneg %p70
        $region38: #{tpu_custom_call.1} parent=31 // pred_check_branch
          %207 = sbr.rel (%p205) target = $region40
        $region39: #{tpu_custom_call.1} parent=31 // pred_region
          %209 = dma.done %s201, 256
        $region40: #{tpu_custom_call.1} parent=31 // pred_fallthru
          _
        %s210 = sand.u32 %s31, 1
        %s211 = scalar_lea.sflag [#allocation3], %s210
        %s212 = sand.u32 %s31, 1
        %s213 = smul.addr %s212, 16
        %s214 = scalar_lea.vmem [#allocation2], %s213
        %p215 = pneg %p44
        %p216 = pneg %p41
        %s217 = sand.u32 %s57, 1
        %s218 = scalar_lea.sflag [#allocation6], %s217
        %s219 = sand.u32 %s57, 1
        %s220 = smul.addr %s219, 16
        %s221 = scalar_lea.vmem [#allocation5], %s220
        %p222 = pneg %p70
        %p223 = pneg %p67
        %p224 = pneg %p91
        %p225 = pneg %p88
        %p226 = pneg %p117
        %p227 = pneg %p114
        %s228 = sand.u32 %s104, 1
        %s229 = scalar_lea.sflag [#allocation4], %s228
        %s230 = sand.u32 %s104, 1
        %s231 = smul.addr %s230, 16
        %s232 = scalar_lea.vmem [#allocation7], %s231
        %v233 = vld [vmem:[%s194] sm:$0xff]
        %v234 = vld [vmem:[%s194 + $0x8] sm:$0xff]
        %v235 = vld [vmem:[%s204] sm:$0xff]
        %v236 = vld [vmem:[%s204 + $0x8] sm:$0xff]
        %v237 = vld [vmem:[%s2] sm:$0xff]
        %v238 = vld [vmem:[%s2 + $0x8] sm:$0xff]
        %241 = vrot.lane.b32.xlu0 %v233, 1
        %v242 = vpop.permute.xlu0 %241
        %243 = vrot.lane.b32.xlu0 %v234, 1
        %v244 = vpop.permute.xlu0 %243
        %vm247 = vcmask 7168
        %v248 = vsel %vm247, 0.0, %v242
        %v249 = vsel %vm247, 0.0, %v244
        %251 = vset.pattern.permute.xlu0 0
        %252 = vperm.xlu0 %251, %v237
        %v253 = vpop.permute.xlu0 %252
        %256 = vset.pattern.permute.xlu0 0
        %257 = vperm.xlu0 %256, %v238
        %v258 = vpop.permute.xlu0 %257
        %v260 = vmul.f32 %v253, %v248
        %v261 = vmul.f32 %v258, %v249
        %264 = vrot.lane.b32.xlu0 %v235, 1
        %v265 = vpop.permute.xlu0 %264
        %266 = vrot.lane.b32.xlu0 %v236, 1
        %v267 = vpop.permute.xlu0 %266
        %v270 = vsel %vm247, 0.0, %v265
        %v271 = vsel %vm247, 0.0, %v267
        %272 = vset.pattern.permute.xlu0 1
        %273 = vperm.xlu0 %272, %v237
        %v274 = vpop.permute.xlu0 %273
        %276 = vset.pattern.permute.xlu0 1
        %277 = vperm.xlu0 %276, %v238
        %v278 = vpop.permute.xlu0 %277
        %v280 = vmul.f32 %v274, %v270
        %v281 = vmul.f32 %v278, %v271
        %v282 = vadd.f32 %v260, %v280
        %v283 = vadd.f32 %v261, %v281
        %284 = vset.pattern.permute.xlu0 2
        %285 = vperm.xlu0 %284, %v237
        %v286 = vpop.permute.xlu0 %285
        %288 = vset.pattern.permute.xlu0 2
        %289 = vperm.xlu0 %288, %v238
        %v290 = vpop.permute.xlu0 %289
        %v292 = vmul.f32 %v286, %v233
        %v293 = vmul.f32 %v290, %v234
        %v294 = vadd.f32 %v282, %v292
        %v295 = vadd.f32 %v283, %v293
        %296 = vset.pattern.permute.xlu0 3
        %297 = vperm.xlu0 %296, %v237
        %v298 = vpop.permute.xlu0 %297
        %300 = vset.pattern.permute.xlu0 3
        %301 = vperm.xlu0 %300, %v238
        %v302 = vpop.permute.xlu0 %301
        %v304 = vmul.f32 %v298, %v235
        %v305 = vmul.f32 %v302, %v236
        %v306 = vadd.f32 %v294, %v304
        %v307 = vadd.f32 %v295, %v305
        %308 = vrot.lane.b32.xlu0 %v233, 127
        %v309 = vpop.permute.xlu0 %308
        %310 = vrot.lane.b32.xlu0 %v234, 127
        %v311 = vpop.permute.xlu0 %310
        %vm314 = vcmask 121856
        %v315 = vsel %vm314, %v309, 0.0
        %v316 = vsel %vm314, %v311, 0.0
        %317 = vset.pattern.permute.xlu0 4
        %318 = vperm.xlu0 %317, %v237
        %v319 = vpop.permute.xlu0 %318
        %321 = vset.pattern.permute.xlu0 4
        %322 = vperm.xlu0 %321, %v238
        %v323 = vpop.permute.xlu0 %322
        %v325 = vmul.f32 %v319, %v315
        %v326 = vmul.f32 %v323, %v316
        %v327 = vadd.f32 %v306, %v325
        %v328 = vadd.f32 %v307, %v326
        %329 = vset.pattern.permute.xlu0 5
        %330 = vperm.xlu0 %329, %v237
        %v331 = vpop.permute.xlu0 %330
        %333 = vset.pattern.permute.xlu0 5
        %334 = vperm.xlu0 %333, %v238
        %v335 = vpop.permute.xlu0 %334
        %v337 = vadd.f32 %v327, %v331
        %v338 = vadd.f32 %v328, %v335
        %vm339 = vcmask 130048
        %v340 = vsel %vm339, %v337, 0.0
        %v341 = vsel %vm339, %v338, 0.0
        %v342 = vadd.f32 %v340, %v341
        %343 = vadd.xlane.f32.xlu0 %v342
        %v344 = vpop.xlane.xlu0 %343
        %v345 = vrot.slane %v344, 4
        %v346 = vadd.f32 %v344, %v345
        %v347 = vrot.slane %v346, 2
        %v348 = vadd.f32 %v346, %v347
        %v349 = vrot.slane %v348, 1
        %v350 = vadd.f32 %v348, %v349
        %s351 = vtos %v350
        %s352 = smul.f32 %s351, 0.00390625
        %v353 = vmul.f32 %v337, %v337
        %v354 = vmul.f32 %v338, %v338
        %v355 = vsel %vm339, %v353, 0.0
        %v356 = vsel %vm339, %v354, 0.0
        %v357 = vadd.f32 %v355, %v356
        %358 = vadd.xlane.f32.xlu0 %v357
        %v359 = vpop.xlane.xlu0 %358
        %v360 = vrot.slane %v359, 4
        %v361 = vadd.f32 %v359, %v360
        %v362 = vrot.slane %v361, 2
        %v363 = vadd.f32 %v361, %v362
        %v364 = vrot.slane %v363, 1
        %v365 = vadd.f32 %v363, %v364
        %s366 = vtos %v365
        %s367 = smul.f32 %s366, 0.00390625
        %s368 = smul.f32 %s352, %s352
        %s369 = ssub.f32 %s367, %s368
        %s370 = smax.f32 %s369, 0.0
        %s371 = sadd.f32 %s370, 1e-08
        %v372 = vstv %s371
        %v373 = vrsqrt.pop %v372
        %v374 = vmul.f32 %v373, %v372
        %v375 = vmul.f32 %v374, %v373
        %v376 = vmul.f32 0.5, %v375
        %v377 = vsub.f32 1.5, %v376
        %v378 = vmul.f32 %v373, %v377
        %vm379 = vweird.f32 %v372
        %vm380 = vweird.f32 %v373
        %vm381 = vmor %vm379, %vm380
        %v382 = vsel %vm381, %v373, %v378
        %s383 = vtos %v382
        %v384 = vstv %s383
        %v385 = vmul.f32 %v237, %v384
        %v386 = vmul.f32 %v238, %v384
        %v387 = vstv %s352
        %v388 = vmul.f32 %v387, %v385
        %v389 = vmul.f32 %v387, %v386
        %392 = vrot.lane.b32.xlu0 %v388, 1
        %v393 = vpop.permute.xlu0 %392
        %394 = vrot.lane.b32.xlu0 %v389, 1
        %v395 = vpop.permute.xlu0 %394
        %v398 = vsub.f32 %v237, %v393
        %v399 = vsub.f32 %v238, %v395
        %401 = vset.pattern.permute.xlu0 6
        %402 = vperm.xlu0 %401, %v385
        %v403 = vpop.permute.xlu0 %402
        %406 = vset.pattern.permute.xlu0 6
        %407 = vperm.xlu0 %406, %v386
        %v408 = vpop.permute.xlu0 %407
        %v410 = vmul.f32 %v337, %v403
        %v411 = vmul.f32 %v338, %v408
        %413 = vset.pattern.permute.xlu0 7
        %414 = vperm.xlu0 %413, %v398
        %v415 = vpop.permute.xlu0 %414
        %418 = vset.pattern.permute.xlu0 7
        %419 = vperm.xlu0 %418, %v399
        %v420 = vpop.permute.xlu0 %419
        %v422 = vadd.f32 %v410, %v415
        %v423 = vadd.f32 %v411, %v420
        %424 = vst.msk [vmem:[%s232] sm:$0xff] %vm339, %v422
        %425 = vst.msk [vmem:[%s232 + $0x8] sm:$0xff] %vm339, %v423
        %s426 = sand.u32 %s104, 1
        %s427 = scalar_lea.sflag [#allocation4], %s426
        %s428 = sand.u32 %s104, 1
        %s429 = smul.addr %s428, 16
        %s430 = scalar_lea.vmem [#allocation7], %s429
        // Predicated region
        $region41: #{tpu_custom_call.1} parent=31 // pred_check
          %p431 = pneg %p114
        $region42: #{tpu_custom_call.1} parent=31 // pred_check_branch
          %433 = sbr.rel (%p431) target = $region44
        $region43: #{tpu_custom_call.1} parent=31 // pred_region
          %435 = vsyncadd %s427, 0
          %s436 = smul.addr %s23, 2
          %s437 = smul.addr %s436, 8
          %s438 = scalar_lea.hbm %s3, %s437
          %s439 = sshll.u32 %s430, 4
          %s440 = int_to_ptr.vmem [resolvable:$true] %s439
          %s441 = sshll.u32 %s438, 4
          %s442 = int_to_ptr.hbm [resolvable:$true] %s441
          %447 = dma.vmem_to_hbm [thread:$0]  %s440, 256, %s442, %s427, 128, 128, 8
        $region44: #{tpu_custom_call.1} parent=31 // pred_fallthru
          _
      $region32: #{tpu_custom_call.1} parent=5 // pred_fallthru
        _
      %p448 = scmp.le.s32.totalorder 2, %s18
      // Predicated region
      $region45: #{tpu_custom_call.1} parent=5 // pred_check
        %p449 = pneg %p448
      $region46: #{tpu_custom_call.1} parent=5 // pred_check_branch
        %451 = sbr.rel (%p449) target = $region48
      $region47: #{tpu_custom_call.1} parent=5 // pred_region
        %s452 = ssub.s32 %s18, 2
        // Predicated region
        $region49: #{tpu_custom_call.1} parent=47 // pred_check
          %p453 = pneg %p120
        $region50: #{tpu_custom_call.1} parent=47 // pred_check_branch
          %455 = sbr.rel (%p453) target = $region52
        $region51: #{tpu_custom_call.1} parent=47 // pred_region
          %s456 = sand.u32 %s105, 1
          %s457 = scalar_lea.sflag [#allocation4], %s456
          %s458 = sand.u32 %s105, 1
          %s459 = smul.addr %s458, 16
          %s460 = scalar_lea.vmem [#allocation7], %s459
          %462 = dma.done %s457, 256
        $region52: #{tpu_custom_call.1} parent=47 // pred_fallthru
          _
      $region48: #{tpu_custom_call.1} parent=5 // pred_fallthru
        _
    $region6: #{tpu_custom_call.1} parent=1 // loop_footer
      %s22 = sadd.s32 1, %s18
    $region7: #{tpu_custom_call.1} parent=1 // loop_footer_branch
      %17 = sbr.rel target = $region3
    $region8: #{tpu_custom_call.1} parent=1 // loop_exit
      _
    %463 = vsyncpa [#allocation3], 1
    %s464 = scalar_lea.sflag [#allocation3], 1
    %465 = vsyncpa %s464, 1
    %466 = vsyncpa [#allocation6], 1
    %s467 = scalar_lea.sflag [#allocation6], 1
    %468 = vsyncpa %s467, 1
    %469 = vsyncpa [#allocation4], 1
    %s470 = scalar_lea.sflag [#allocation4], 1
    %471 = vsyncpa %s470, 1

</llo_original>
